<compile_context>
chip_gen: v5e
topology: v5e:2x2
jax: 0.10.0
libtpu: 0.0.40
codegen_flags: <defaults>
</compile_context>

<pallas_src>
import jax
import jax.numpy as jnp
from jax.experimental import pallas as pl
from jax.experimental.pallas import tpu as pltpu


def _make_kernel(apply_relu6: bool):
    def kernel(tapsT_ref, w_ref, b_ref, out_ref):
        # tapsT_ref: (KK*Cin, Mt)   w_ref: (Cout, KK*Cin)   b_ref: (Cout, 1)
        # out_ref:   (Cout, Mt)
        y = jnp.dot(w_ref[...], tapsT_ref[...], preferred_element_type=jnp.float32)
        y = y + b_ref[...]                      # fused bias (+ BN shift), f32
        if apply_relu6:
            y = jnp.clip(y, 0.0, 6.0)           # ReLU6
        out_ref[...] = y.astype(out_ref.dtype)
    return kernel


def depthwise_separable_conv(x, w_dw, w_pw, b_pw, bn_params=None,
                             kernel_size=3, stride=2, use_bf16_matmul=True):
    """x: (N, C, H, W) float32 (PyTorch NCHW). Returns (N, Cout, Ho, Wo) float32."""
    N, C, H, W = x.shape
    Cout = w_pw.shape[0]
    K = kernel_size
    pad = K // 2                                 # module uses padding=kernel_size//2
    Ho = (H + 2 * pad - K) // stride + 1
    Wo = (W + 2 * pad - K) // stride + 1
    P = Ho * Wo
    KK = K * K
    KKC = KK * C
    M = N * P

    # --- glue: pad NCHW, one input-sized transpose, build taps directly as (KK*C, M) ---
    xp = jnp.pad(x, ((0, 0), (0, 0), (pad, pad), (pad, pad)))     # (N, C, Hp, Wp)
    xp = jnp.transpose(xp, (1, 0, 2, 3))                          # (C, N, Hp, Wp)
    taps = []
    for kh in range(K):
        for kw in range(K):
            t = xp[:, :, kh:kh + stride * (Ho - 1) + 1:stride,
                         kw:kw + stride * (Wo - 1) + 1:stride]    # (C, N, Ho, Wo)
            taps.append(t.reshape(C, M))
    tapsT = jnp.concatenate(taps, axis=0)                         # (KK*C, M), kk-major, M on lanes

    # --- fold depthwise weight (and BN scale) into pointwise weight; fold bias + shift ---
    wdw_kkc = jnp.transpose(w_dw.reshape(C, KK), (1, 0))          # (KK, C)
    wpw = w_pw.reshape(Cout, C)                                   # (Cout, C)
    w_fused = (wpw[:, None, :] * wdw_kkc[None, :, :]).reshape(Cout, KKC)
    bias = b_pw
    apply_relu6 = bn_params is not None
    if apply_relu6:
        gamma, beta, mean, var, eps = bn_params
        inv_std = 1.0 / jnp.sqrt(var + eps)
        scale = gamma * inv_std
        shift = beta - mean * scale
        w_fused = w_fused * scale[:, None]
        bias = b_pw * scale + shift
    bias = bias.reshape(Cout, 1).astype(jnp.float32)

    if use_bf16_matmul:
        # bf16 taps + fused weight, f32 accumulation (native MXU path on all generations).
        tapsT = tapsT.astype(jnp.bfloat16)
        w_in = w_fused.astype(jnp.bfloat16)
    else:
        w_in = w_fused

    # --- pick a lane-dense M tile under an explicit VMEM budget ---
    elem_bytes = 2 if use_bf16_matmul else 4
    # double-buffered tap tile (input dtype) + double-buffered f32 output tile, per M column
    bytes_per_col = elem_bytes * 2 * KKC + 4 * 2 * Cout
    vmem_budget = 24 * 1024 * 1024                  # in-kernel usage budget
    vmem_limit = 32 * 1024 * 1024                   # scoped limit passed to Mosaic (safe on v5e/v6e/v7x)
    mt = (vmem_budget // bytes_per_col) // 128 * 128
    mt = max(128, min(mt, 32768))
    M128 = ((M + 127) // 128) * 128
    if M128 >= 256:
        # keep >= 2 tiles so the "parallel" grid axis can feed both v7x TensorCores
        half = ((M128 // 128 + 1) // 2) * 128
        mt = min(mt, half)
    mt = min(mt, M128)
    num_tiles = pl.cdiv(M, mt)                       # ragged last block handled by Pallas

    out = pl.pallas_call(
        _make_kernel(apply_relu6),
        out_shape=jax.ShapeDtypeStruct((Cout, M), jnp.float32),
        grid=(num_tiles,),
        in_specs=[
            pl.BlockSpec((KKC, mt), lambda i: (0, i)),     # tap columns (tiled along M)
            pl.BlockSpec((Cout, KKC), lambda i: (0, 0)),   # fused weight (resident)
            pl.BlockSpec((Cout, 1), lambda i: (0, 0)),     # fused bias   (resident)
        ],
        out_specs=pl.BlockSpec((Cout, mt), lambda i: (0, i)),
        compiler_params=pltpu.CompilerParams(
            dimension_semantics=("parallel",),
            vmem_limit_bytes=vmem_limit),
    )(tapsT, w_in, bias)

    # (Cout, N*P) -> (N, Cout, Ho, Wo)
    # TODO(synk): for large outputs, a 2D (batch, M-tile) grid with per-batch out blocks
    # would avoid this output-sized XLA reshape/transpose; minor vs. the taps stream here.
    out = out.reshape(Cout, N, Ho, Wo)
    return jnp.transpose(out, (1, 0, 2, 3))


def _reference(x, w_dw, w_pw, b_pw, bn_params, stride=2, pad=1):
    """Pure-JAX reference mirroring the PyTorch forward (eval-mode BN)."""
    y = jax.lax.conv_general_dilated(
        x, w_dw, window_strides=(stride, stride), padding=((pad, pad), (pad, pad)),
        dimension_numbers=("NCHW", "OIHW", "NCHW"),
        feature_group_count=x.shape[1], precision=jax.lax.Precision.HIGHEST)
    y = jax.lax.conv_general_dilated(
        y, w_pw, window_strides=(1, 1), padding="VALID",
        dimension_numbers=("NCHW", "OIHW", "NCHW"),
        precision=jax.lax.Precision.HIGHEST)
    y = y + b_pw.reshape(1, -1, 1, 1)
    if bn_params is not None:
        gamma, beta, mean, var, eps = bn_params
        y = (y - mean.reshape(1, -1, 1, 1)) / jnp.sqrt(var.reshape(1, -1, 1, 1) + eps)
        y = y * gamma.reshape(1, -1, 1, 1) + beta.reshape(1, -1, 1, 1)
        y = jnp.clip(y, 0.0, 6.0)
    return y


if __name__ == "__main__":
    # Small shapes consistent with the module: batch=2, in_channels=4, spatial=16x16,
    # out_channels=8, kernel_size=3, stride=2, padding=1, bn_act=True.
    N, Cin, H, W = 2, 4, 16, 16
    Cout, K = 8, 3

    key = jax.random.PRNGKey(0)
    kx, kdw, kpw, kb, kg, kbeta, km, kv = jax.random.split(key, 8)

    x = jax.random.normal(kx, (N, Cin, H, W), jnp.float32)
    w_dw = jax.random.normal(kdw, (Cin, 1, K, K), jnp.float32) * 0.3   # depthwise (groups=Cin)
    w_pw = jax.random.normal(kpw, (Cout, Cin, 1, 1), jnp.float32) * 0.3
    b_pw = jax.random.normal(kb, (Cout,), jnp.float32) * 0.1

    # deterministic eval-mode BatchNorm parameters
    gamma = 1.0 + 0.1 * jax.random.normal(kg, (Cout,), jnp.float32)
    beta = 0.1 * jax.random.normal(kbeta, (Cout,), jnp.float32)
    running_mean = 0.1 * jax.random.normal(km, (Cout,), jnp.float32)
    running_var = jnp.abs(jax.random.normal(kv, (Cout,), jnp.float32)) + 0.5
    bn_params = (gamma, beta, running_mean, running_var, 1e-5)

    ref = _reference(x, w_dw, w_pw, b_pw, bn_params)
    ref2 = _reference(x, w_dw, w_pw, b_pw, None)

    # bn_act=True path, default bf16 taps (f32 accumulation)
    out = depthwise_separable_conv(x, w_dw, w_pw, b_pw, bn_params=bn_params,
                                   kernel_size=K, stride=2)
    out = jax.block_until_ready(out)
    assert out.shape == (N, Cout, 8, 8), out.shape
    assert jnp.allclose(out, ref, atol=2e-2, rtol=2e-2), \
        float(jnp.max(jnp.abs(out - ref)))

    # bn_act=True path, exact f32 taps
    out_f32 = depthwise_separable_conv(x, w_dw, w_pw, b_pw, bn_params=bn_params,
                                       kernel_size=K, stride=2, use_bf16_matmul=False)
    out_f32 = jax.block_until_ready(out_f32)
    assert jnp.allclose(out_f32, ref, atol=1e-3, rtol=1e-3), \
        float(jnp.max(jnp.abs(out_f32 - ref)))

    # bn_act=False path (no BN/ReLU6 inputs passed at all), default bf16 taps
    out2 = depthwise_separable_conv(x, w_dw, w_pw, b_pw, bn_params=None,
                                    kernel_size=K, stride=2)
    out2 = jax.block_until_ready(out2)
    assert jnp.allclose(out2, ref2, atol=2e-2, rtol=2e-2), \
        float(jnp.max(jnp.abs(out2 - ref2)))

    print("KERNEL_OK")
</pallas_src>

<mosaic_0001>
module attributes {stable_mosaic.version = 11 : i64} {
  func.func @kernel(%arg0: i32, %arg1: memref<36x128xbf16, #tpu.memory_space<vmem>>, %arg2: memref<8x36xbf16, #tpu.memory_space<vmem>>, %arg3: memref<8x1xf32, #tpu.memory_space<vmem>>, %arg4: memref<8x128xf32, #tpu.memory_space<vmem>>) attributes {dimension_semantics = [#tpu.dimension_semantics<parallel>], iteration_bounds = array<i64: 1>, scalar_prefetch = 0 : i64, scratch_operands = 0 : i64, tpu.core_type = #tpu.core_type<tc>, window_params = [{transform_indices = @transform_0, window_bounds = array<i64: 36, 128>}, {pipeline_mode = #tpu.pipeline_mode<synchronous>, transform_indices = @transform_1, window_bounds = array<i64: 8, 36>}, {pipeline_mode = #tpu.pipeline_mode<synchronous>, transform_indices = @transform_2, window_bounds = array<i64: 8, 1>}, {transform_indices = @transform_3, window_bounds = array<i64: 8, 128>}]} {
    %c0 = arith.constant 0 : index
    %c0_0 = arith.constant 0 : index
    %0 = vector.load %arg2[%c0, %c0_0] : memref<8x36xbf16, #tpu.memory_space<vmem>>, vector<8x36xbf16>
    %c0_1 = arith.constant 0 : index
    %c0_2 = arith.constant 0 : index
    %1 = vector.load %arg1[%c0_1, %c0_2] : memref<36x128xbf16, #tpu.memory_space<vmem>>, vector<36x128xbf16>
    %cst = arith.constant dense<0.000000e+00> : vector<8x128xf32>
    %2 = tpu.matmul %0, %1, %cst {dimension_numbers = #tpu.dot_dimension_numbers<[1], [0], [0], [1], [0, 0, 1, 1], [], []>} : vector<8x36xbf16>, vector<36x128xbf16>, vector<8x128xf32> -> vector<8x128xf32>
    %c0_3 = arith.constant 0 : index
    %c0_4 = arith.constant 0 : index
    %3 = vector.load %arg3[%c0_3, %c0_4] : memref<8x1xf32, #tpu.memory_space<vmem>>, vector<8x1xf32>
    %4 = vector.broadcast %3 : vector<8x1xf32> to vector<8x128xf32>
    %5 = arith.addf %2, %4 : vector<8x128xf32>
    %cst_5 = arith.constant 0.000000e+00 : f32
    %cst_6 = arith.constant 6.000000e+00 : f32
    %6 = vector.broadcast %cst_5 : f32 to vector<8x128xf32>
    %7 = arith.maximumf %6, %5 : vector<8x128xf32>
    %8 = vector.broadcast %cst_6 : f32 to vector<8x128xf32>
    %9 = arith.minimumf %8, %7 : vector<8x128xf32>
    %c0_7 = arith.constant 0 : index
    %c0_8 = arith.constant 0 : index
    %10 = vector.load %arg4[%c0_7, %c0_8] : memref<8x128xf32, #tpu.memory_space<vmem>>, vector<8x128xf32>
    tpu.vector_store %arg4[%c0_7, %c0_8], %9 {strides = array<i32>} : memref<8x128xf32, #tpu.memory_space<vmem>>, vector<8x128xf32>,
    return
  }
  func.func @transform_0(%arg0: i32) -> (i32, i32) {
    %c0_i32 = arith.constant 0 : i32
    %c0_i32_0 = arith.constant 0 : i32
    return %c0_i32, %arg0 : i32, i32
  }
  func.func @transform_1(%arg0: i32) -> (i32, i32) {
    %c0_i32 = arith.constant 0 : i32
    %c0_i32_0 = arith.constant 0 : i32
    %c0_i32_1 = arith.constant 0 : i32
    return %c0_i32, %c0_i32_0 : i32, i32
  }
  func.func @transform_2(%arg0: i32) -> (i32, i32) {
    %c0_i32 = arith.constant 0 : i32
    %c0_i32_0 = arith.constant 0 : i32
    %c0_i32_1 = arith.constant 0 : i32
    return %c0_i32, %c0_i32_0 : i32, i32
  }
  func.func @transform_3(%arg0: i32) -> (i32, i32) {
    %c0_i32 = arith.constant 0 : i32
    %c0_i32_0 = arith.constant 0 : i32
    return %c0_i32, %arg0 : i32, i32
  }
}

</mosaic_0001>

<llo_original>
// kernel: tpu_custom_call.1
$region0: #{tpu_custom_call.1}
  #allocation0 [shape = 'u32[]', space=smem, size = 0x4, offset = 0x4, fixed_abs, tag = 'smem constant byte address 0x4 - core index']
  #allocation1 [shape = 'u32[72,128]{1,0:T(1,128)}', space=vmem, size = 0x9000, scoped, tag = 'internal scratch']
  %s0 = inlined_call_operand.hbm [shape: bf16[36,128], index: 0, kind: input, shape index: {}]
  %s1 = inlined_call_operand.vmem [shape: bf16[8,36], index: 1, kind: input, shape index: {}]
  %s2 = inlined_call_operand.vmem [shape: f32[8,1], index: 2, kind: input, shape index: {}]
  %s3 = inlined_call_operand.hbm [shape: f32[8,128], index: 3, kind: output, shape index: {}]
  %s4 = sld [smem:[#allocation0]]
  $region26: #{tpu_custom_call.1} parent=0
    _
  %s6 = ssub.s32 1, %s4
  %s7 = scalar_select 0, %s6, %s4
  $region1: #{tpu_custom_call.1} parent=0
    #allocation2 [shape = 'u8[10240]{0}', space=vmem, size = 0x2800, scoped, tag = 'input window, operand 0, single buffered']
    #allocation3 [shape = 's32[1]{0}', space=sflag, size = 0x4, scoped, tag = 'scoped memory for tpu_custom_call.1']
    #allocation4 [shape = 's32[1]{0}', space=sflag, size = 0x4, scoped, tag = 'scoped memory for tpu_custom_call.1']
    #allocation5 [shape = 'u8[4096]{0}', space=vmem, size = 0x1000, scoped, tag = 'output window, operand 0, single buffered']
    %8 = vsyncpa [#allocation3], 0
    %9 = vsyncpa [#allocation4], 0
    // Predicated region
    $region2: #{tpu_custom_call.1} parent=1 // pred_check
      _
    $region3: #{tpu_custom_call.1} parent=1 // pred_check_branch
      %11 = sbr.rel (0) target = $region5
    $region4: #{tpu_custom_call.1} parent=1 // pred_region
      %13 = vsyncadd [#allocation3], 0
      %s14 = sshll.u32 %s0, 4
      %s15 = int_to_ptr.hbm [resolvable:$true] %s14
      %s16 = sshll.u32 [#allocation2], 4
      %s17 = int_to_ptr.vmem [resolvable:$true] %s16
      %22 = dma.hbm_to_vmem [thread:$0]  %s15, 320, %s17, [#allocation3], 64, 64, 4
    $region5: #{tpu_custom_call.1} parent=1 // pred_fallthru
      _
    // Predicated region
    $region6: #{tpu_custom_call.1} parent=1 // pred_check
      _
    $region7: #{tpu_custom_call.1} parent=1 // pred_check_branch
      %24 = sbr.rel (0) target = $region9
    $region8: #{tpu_custom_call.1} parent=1 // pred_region
      _
    $region9: #{tpu_custom_call.1} parent=1 // pred_fallthru
      _
    // Predicated region
    $region10: #{tpu_custom_call.1} parent=1 // pred_check
      _
    $region11: #{tpu_custom_call.1} parent=1 // pred_check_branch
      %26 = sbr.rel (0) target = $region13
    $region12: #{tpu_custom_call.1} parent=1 // pred_region
      _
    $region13: #{tpu_custom_call.1} parent=1 // pred_fallthru
      _
    // Predicated region
    $region14: #{tpu_custom_call.1} parent=1 // pred_check
      _
    $region15: #{tpu_custom_call.1} parent=1 // pred_check_branch
      %28 = sbr.rel (0) target = $region17
    $region16: #{tpu_custom_call.1} parent=1 // pred_region
      %30 = dma.done [#allocation3], 320
    $region17: #{tpu_custom_call.1} parent=1 // pred_fallthru
      _
    %v32 = vld [vmem:[%s1] sm:$0xf]
    %v33 = vld [vmem:[#allocation2] sm:$0xf]
    %v34 = vld [vmem:[#allocation2 + $0x4] sm:$0xf]
    %v35 = vld [vmem:[#allocation2 + $0x8] sm:$0xf]
    %v36 = vld [vmem:[#allocation2 + $0xc] sm:$0xf]
    %v37 = vld [vmem:[#allocation2 + $0x10] sm:$0x3]
    %v38 = vld [vmem:[%s2] sm:$0xff]
    %40 = vset.pattern.permute.xlu0 0
    %41 = vperm.xlu0 %40, %v38
    %v42 = vpop.permute.xlu0 %41
    %v49 = vunpack.c.l.b16 %v33
    %v50 = vunpack.c.l.b16 %v34
    %v51 = vunpack.c.l.b16 %v35
    %v52 = vunpack.c.l.b16 %v36
    %v53 = vunpack.c.l.b16 %v37
    %v54 = vpack.c.b16 %v50, %v49
    %v55 = vpack.c.b16 %v52, %v51
    %v56 = vpack.c.b16 %v53, %v53
    %vm59 = vcmask 293888
    %v61 = vsel %vm59, %v32, 0
    %vm63 = vcmask 1041408
    %v65 = vsel %vm63, %v56, 0
    %67 = vmatpush.bf16.msra.mxu0 0
    %68 = vmatpush.bf16.msra.mxu0 0
    %69 = vmatpush.bf16.msra.mxu0 0
    %70 = vmatpush.bf16.msra.mxu0 0
    %71 = vmatpush.bf16.msra.mxu0 0
    %72 = vmatpush.bf16.msra.mxu0 %v65
    %73 = vmatpush.bf16.msra.mxu0 %v55
    %74 = vmatpush.bf16.msra.mxu0 %v54
    %75 = vmatmul.bf16.gmra.mxu0 %v61
    %v76 = vpop.f32.mrf.mxu0
    %v77 = vadd.f32 %v42, %v76
    %v78 = vpop.f32.mrf.mxu0
    %79 = vdwg.mxu0
    %v80 = vmax.f32 %v77, 0.0
    %v81 = vmin.f32 %v80, 6.0
    %82 = vst [vmem:[#allocation5] sm:$0xff] %v81
    // Predicated region
    $region18: #{tpu_custom_call.1} parent=1 // pred_check
      _
    $region19: #{tpu_custom_call.1} parent=1 // pred_check_branch
      %84 = sbr.rel (0) target = $region21
    $region20: #{tpu_custom_call.1} parent=1 // pred_region
      %86 = vsyncadd [#allocation4], 0
      %s88 = sshll.u32 [#allocation5], 4
      %s89 = int_to_ptr.vmem [resolvable:$true] %s88
      %s90 = sshll.u32 %s3, 4
      %s91 = int_to_ptr.hbm [resolvable:$true] %s90
      %93 = dma.vmem_to_hbm [thread:$0]  %s89, 128, %s91, [#allocation4]
    $region21: #{tpu_custom_call.1} parent=1 // pred_fallthru
      _
    // Predicated region
    $region22: #{tpu_custom_call.1} parent=1 // pred_check
      _
    $region23: #{tpu_custom_call.1} parent=1 // pred_check_branch
      %95 = sbr.rel (0) target = $region25
    $region24: #{tpu_custom_call.1} parent=1 // pred_region
      %97 = dma.done [#allocation4], 128
    $region25: #{tpu_custom_call.1} parent=1 // pred_fallthru
      _
    %98 = vsyncpa [#allocation3], 1
    %99 = vsyncpa [#allocation4], 1

</llo_original>
